<compile_context>
chip_gen: v5e
topology: v5e:2x2
jax: 0.10.0
libtpu: 0.0.40
codegen_flags: <defaults>
</compile_context>

<pallas_src>
import jax
import jax.numpy as jnp
from jax.experimental import pallas as pl
from jax.experimental.pallas import tpu as pltpu


def _round_up(x: int, m: int) -> int:
    return (x + m - 1) // m * m


def classblock_kernel(x_ref, w_ref, o_ref, acc_ref):
    """x_ref: (tb, tk), w_ref: (tk, tc) [already (D, C) layout], o_ref: (tb, tc)."""
    k = pl.program_id(2)

    @pl.when(k == 0)
    def _init():
        acc_ref[...] = jnp.zeros_like(acc_ref)

    # MXU matmul, f32 accumulation. No transpose: contraction is on the last
    # axis of x and the first axis of the pre-transposed weight.
    acc_ref[...] += jnp.dot(
        x_ref[...], w_ref[...], preferred_element_type=jnp.float32
    )

    @pl.when(k == pl.num_programs(2) - 1)
    def _finalize():
        z = acc_ref[...]
        # sigmoid(z) = 1 / (1 + exp(-z)); exp and approx reciprocal both run on
        # the EUP slot, keeping the VPU divide off the critical path.
        sig = pl.reciprocal(1.0 + jnp.exp(-z), approx=True)
        o_ref[...] = sig.astype(o_ref.dtype)


def class_block_forward(x, w, *, tb=256, tc=256, tk=512):
    """x: (B, D) float32, w: (C, D) float32  ->  sigmoid(x @ w.T) of shape (B, C)."""
    B, D = x.shape
    C, D2 = w.shape
    assert D == D2, "feature dims must match"

    # Pre-transpose the weight once outside the kernel: (C, D) -> (D, C).
    wt = w.T

    # Pad to hardware-friendly extents: sublane multiple of 8, lane multiple of 128.
    B_pad = _round_up(B, 8)
    D_pad = _round_up(D, 128)
    C_pad = _round_up(C, 128)

    # Clamp tiles to the padded extents, then make extents divisible by tiles.
    tb = min(tb, B_pad)
    tc = min(tc, C_pad)
    tk = min(tk, D_pad)
    B_pad = _round_up(B_pad, tb)
    C_pad = _round_up(C_pad, tc)
    D_pad = _round_up(D_pad, tk)

    x_p = jnp.zeros((B_pad, D_pad), jnp.float32).at[:B, :D].set(x.astype(jnp.float32))
    w_p = jnp.zeros((D_pad, C_pad), jnp.float32).at[:D, :C].set(wt.astype(jnp.float32))

    grid = (B_pad // tb, C_pad // tc, D_pad // tk)

    out_padded = pl.pallas_call(
        classblock_kernel,
        out_shape=jax.ShapeDtypeStruct((B_pad, C_pad), jnp.float32),
        grid_spec=pltpu.PrefetchScalarGridSpec(
            num_scalar_prefetch=0,
            grid=grid,
            in_specs=[
                pl.BlockSpec((tb, tk), lambda i, j, k: (i, k)),   # x tile
                pl.BlockSpec((tk, tc), lambda i, j, k: (k, j)),   # w (D,C) tile
            ],
            out_specs=pl.BlockSpec((tb, tc), lambda i, j, k: (i, j)),
            scratch_shapes=[pltpu.VMEM((tb, tc), jnp.float32)],
        ),
        compiler_params=pltpu.CompilerParams(
            dimension_semantics=("parallel", "parallel", "arbitrary"),
        ),
    )(x_p, w_p)

    return out_padded[:B, :C]


if __name__ == "__main__":
    key = jax.random.PRNGKey(0)
    kx, kw = jax.random.split(key)

    # Small shapes consistent with the module: batch=8, input_dim=32, class_num=1.
    B, D, C = 8, 32, 1

    x = jax.random.normal(kx, (B, D), dtype=jnp.float32)
    # weights_init_classifier: Linear weight ~ N(0, 0.001), bias=False.
    w = 0.001 * jax.random.normal(kw, (C, D), dtype=jnp.float32)

    y = class_block_forward(x, w)
    y = jax.block_until_ready(y)

    # Pure-JAX reference (Linear without bias + sigmoid). Slightly relaxed
    # tolerance because the kernel uses the EUP approximate reciprocal.
    ref = jax.nn.sigmoid(x @ w.T)
    assert y.shape == (B, C)
    assert jnp.allclose(y, ref, atol=2e-3), "mismatch vs reference"

    print("KERNEL_OK")
</pallas_src>

<mosaic_0001>
module attributes {stable_mosaic.version = 11 : i64} {
  func.func @classblock_kernel(%arg0: i32, %arg1: i32, %arg2: i32, %arg3: memref<8x128xf32, #tpu.memory_space<vmem>>, %arg4: memref<128x128xf32, #tpu.memory_space<vmem>>, %arg5: memref<8x128xf32, #tpu.memory_space<vmem>>, %arg6: memref<8x128xf32, #tpu.memory_space<vmem>>) attributes {dimension_semantics = [#tpu.dimension_semantics<parallel>, #tpu.dimension_semantics<parallel>, #tpu.dimension_semantics<arbitrary>], iteration_bounds = array<i64: 1, 1, 1>, scalar_prefetch = 0 : i64, scratch_operands = 1 : i64, tpu.core_type = #tpu.core_type<tc>, window_params = [{transform_indices = @transform_0, window_bounds = array<i64: 8, 128>}, {transform_indices = @transform_1, window_bounds = array<i64: 128, 128>}, {transform_indices = @transform_2, window_bounds = array<i64: 8, 128>}]} {
    %c0_i32 = arith.constant 0 : i32
    %0 = arith.cmpi eq, %arg2, %c0_i32 : i32
    %1 = arith.extui %0 : i1 to i32
    %c0_i32_0 = arith.constant 0 : i32
    %2 = arith.cmpi ne, %1, %c0_i32_0 : i32
    scf.if %2 {
      %cst_10 = arith.constant 0.000000e+00 : f32
      %12 = vector.broadcast %cst_10 : f32 to vector<8x128xf32>
      %c0_11 = arith.constant 0 : index
      %c0_12 = arith.constant 0 : index
      %13 = vector.load %arg6[%c0_11, %c0_12] : memref<8x128xf32, #tpu.memory_space<vmem>>, vector<8x128xf32>
      tpu.vector_store %arg6[%c0_11, %c0_12], %12 {strides = array<i32>} : memref<8x128xf32, #tpu.memory_space<vmem>>, vector<8x128xf32>,
    } else {
    }
    %c0 = arith.constant 0 : index
    %c0_1 = arith.constant 0 : index
    %3 = vector.load %arg6[%c0, %c0_1] : memref<8x128xf32, #tpu.memory_space<vmem>>, vector<8x128xf32>
    %c0_2 = arith.constant 0 : index
    %c0_3 = arith.constant 0 : index
    %4 = vector.load %arg3[%c0_2, %c0_3] : memref<8x128xf32, #tpu.memory_space<vmem>>, vector<8x128xf32>
    %c0_4 = arith.constant 0 : index
    %c0_5 = arith.constant 0 : index
    %5 = vector.load %arg4[%c0_4, %c0_5] : memref<128x128xf32, #tpu.memory_space<vmem>>, vector<128x128xf32>
    %cst = arith.constant dense<0.000000e+00> : vector<8x128xf32>
    %6 = tpu.matmul %4, %5, %cst {dimension_numbers = #tpu.dot_dimension_numbers<[1], [0], [0], [1], [0, 0, 1, 1], [], []>} : vector<8x128xf32>, vector<128x128xf32>, vector<8x128xf32> -> vector<8x128xf32>
    %7 = arith.addf %3, %6 : vector<8x128xf32>
    %c0_6 = arith.constant 0 : index
    %c0_7 = arith.constant 0 : index
    %8 = vector.load %arg6[%c0_6, %c0_7] : memref<8x128xf32, #tpu.memory_space<vmem>>, vector<8x128xf32>
    tpu.vector_store %arg6[%c0_6, %c0_7], %7 {strides = array<i32>} : memref<8x128xf32, #tpu.memory_space<vmem>>, vector<8x128xf32>,
    %c0_i32_8 = arith.constant 0 : i32
    %9 = arith.cmpi eq, %arg2, %c0_i32_8 : i32
    %10 = arith.extui %9 : i1 to i32
    %c0_i32_9 = arith.constant 0 : i32
    %11 = arith.cmpi ne, %10, %c0_i32_9 : i32
    scf.if %11 {
      %c0_10 = arith.constant 0 : index
      %c0_11 = arith.constant 0 : index
      %12 = vector.load %arg6[%c0_10, %c0_11] : memref<8x128xf32, #tpu.memory_space<vmem>>, vector<8x128xf32>
      %cst_12 = arith.constant 0.000000e+00 : f32
      %13 = vector.broadcast %cst_12 : f32 to vector<8x128xf32>
      %14 = arith.subf %13, %12 : vector<8x128xf32>
      %15 = math.exp %14 : vector<8x128xf32>
      %cst_13 = arith.constant 1.000000e+00 : f32
      %16 = vector.broadcast %cst_13 : f32 to vector<8x128xf32>
      %17 = arith.addf %16, %15 : vector<8x128xf32>
      %18 = tpu.reciprocal %17 {approx = true} : vector<8x128xf32> -> vector<8x128xf32>
      %c0_14 = arith.constant 0 : index
      %c0_15 = arith.constant 0 : index
      %19 = vector.load %arg5[%c0_14, %c0_15] : memref<8x128xf32, #tpu.memory_space<vmem>>, vector<8x128xf32>
      tpu.vector_store %arg5[%c0_14, %c0_15], %18 {strides = array<i32>} : memref<8x128xf32, #tpu.memory_space<vmem>>, vector<8x128xf32>,
    } else {
    }
    return
  }
  func.func @transform_0(%arg0: i32, %arg1: i32, %arg2: i32) -> (i32, i32) {
    %c0_i32 = arith.constant 0 : i32
    return %arg0, %arg2 : i32, i32
  }
  func.func @transform_1(%arg0: i32, %arg1: i32, %arg2: i32) -> (i32, i32) {
    %c0_i32 = arith.constant 0 : i32
    return %arg2, %arg1 : i32, i32
  }
  func.func @transform_2(%arg0: i32, %arg1: i32, %arg2: i32) -> (i32, i32) {
    %c0_i32 = arith.constant 0 : i32
    return %arg0, %arg1 : i32, i32
  }
}

</mosaic_0001>

<llo_original>
// kernel: tpu_custom_call.1
$region0: #{tpu_custom_call.1}
  #allocation0 [shape = 'u32[]', space=smem, size = 0x4, offset = 0x4, fixed_abs, tag = 'smem constant byte address 0x4 - core index']
  #allocation1 [shape = 'u32[72,128]{1,0:T(1,128)}', space=vmem, size = 0x9000, scoped, tag = 'internal scratch']
  #allocation2 [shape = 'f32[8,128]{1,0:T(8,128)}', space=vmem, size = 0x1000, scoped, tag = 'scratch operand']
  %s0 = inlined_call_operand.hbm [shape: f32[8,128], index: 0, kind: input, shape index: {}]
  %s1 = inlined_call_operand.hbm [shape: f32[128,128], index: 1, kind: input, shape index: {}]
  %s2 = inlined_call_operand.hbm [shape: f32[8,128], index: 2, kind: output, shape index: {}]
  %s3 = sld [smem:[#allocation0]]
  $region34: #{tpu_custom_call.1} parent=0
    _
  %s5 = ssub.s32 1, %s3
  %s6 = scalar_select 0, %s5, %s3
  $region1: #{tpu_custom_call.1} parent=0
    #allocation3 [shape = 'u8[4096]{0}', space=vmem, size = 0x1000, scoped, tag = 'input window, operand 0, single buffered']
    #allocation4 [shape = 's32[1]{0}', space=sflag, size = 0x4, scoped, tag = 'scoped memory for tpu_custom_call.1']
    #allocation5 [shape = 's32[1]{0}', space=sflag, size = 0x4, scoped, tag = 'scoped memory for tpu_custom_call.1']
    #allocation6 [shape = 'u8[65536]{0}', space=vmem, size = 0x10000, scoped, tag = 'input window, operand 1, single buffered']
    #allocation7 [shape = 's32[1]{0}', space=sflag, size = 0x4, scoped, tag = 'scoped memory for tpu_custom_call.1']
    #allocation8 [shape = 'u8[4096]{0}', space=vmem, size = 0x1000, scoped, tag = 'output window, operand 0, single buffered']
    %7 = vsyncpa [#allocation4], 0
    %8 = vsyncpa [#allocation7], 0
    %9 = vsyncpa [#allocation5], 0
    // Predicated region
    $region2: #{tpu_custom_call.1} parent=1 // pred_check
      _
    $region3: #{tpu_custom_call.1} parent=1 // pred_check_branch
      %11 = sbr.rel (0) target = $region5
    $region4: #{tpu_custom_call.1} parent=1 // pred_region
      %13 = vsyncadd [#allocation4], 0
      %s15 = sshll.u32 %s0, 4
      %s16 = int_to_ptr.hbm [resolvable:$true] %s15
      %s17 = sshll.u32 [#allocation3], 4
      %s18 = int_to_ptr.vmem [resolvable:$true] %s17
      %20 = dma.hbm_to_vmem [thread:$0]  %s16, 128, %s18, [#allocation4]
    $region5: #{tpu_custom_call.1} parent=1 // pred_fallthru
      _
    // Predicated region
    $region6: #{tpu_custom_call.1} parent=1 // pred_check
      _
    $region7: #{tpu_custom_call.1} parent=1 // pred_check_branch
      %22 = sbr.rel (0) target = $region9
    $region8: #{tpu_custom_call.1} parent=1 // pred_region
      %24 = vsyncadd [#allocation7], 0
      %s25 = sshll.u32 %s1, 4
      %s26 = int_to_ptr.hbm [resolvable:$true] %s25
      %s27 = sshll.u32 [#allocation6], 4
      %s28 = int_to_ptr.vmem [resolvable:$true] %s27
      %33 = dma.hbm_to_vmem [thread:$0]  %s26, 2048, %s28, [#allocation7], 128, 128, 8
    $region9: #{tpu_custom_call.1} parent=1 // pred_fallthru
      _
    // Predicated region
    $region10: #{tpu_custom_call.1} parent=1 // pred_check
      _
    $region11: #{tpu_custom_call.1} parent=1 // pred_check_branch
      %35 = sbr.rel (0) target = $region13
    $region12: #{tpu_custom_call.1} parent=1 // pred_region
      %37 = dma.done [#allocation4], 128
    $region13: #{tpu_custom_call.1} parent=1 // pred_fallthru
      _
    // Predicated region
    $region14: #{tpu_custom_call.1} parent=1 // pred_check
      _
    $region15: #{tpu_custom_call.1} parent=1 // pred_check_branch
      %39 = sbr.rel (0) target = $region17
    $region16: #{tpu_custom_call.1} parent=1 // pred_region
      %41 = dma.done [#allocation7], 2048
    $region17: #{tpu_custom_call.1} parent=1 // pred_fallthru
      _
    %p42 = scmp.eq.s32.totalorder 0, 0
    // Predicated region
    $region18: #{tpu_custom_call.1} parent=1 // pred_check
      %p43 = pneg %p42
    $region19: #{tpu_custom_call.1} parent=1 // pred_check_branch
      %45 = sbr.rel (%p43) target = $region21
    $region20: #{tpu_custom_call.1} parent=1 // pred_region
      %46 = vst [vmem:[#allocation2] sm:$0xff] 0.0
    $region21: #{tpu_custom_call.1} parent=1 // pred_fallthru
      _
    %v47 = vld [vmem:[#allocation2] sm:$0xff]
    %v48 = vld [vmem:[#allocation3] sm:$0xff]
    %v49 = vld [vmem:[#allocation6] sm:$0xff]
    %v50 = vld [vmem:[#allocation6 + $0x8] sm:$0xff]
    %v51 = vld [vmem:[#allocation6 + $0x10] sm:$0xff]
    %v52 = vld [vmem:[#allocation6 + $0x18] sm:$0xff]
    %v53 = vld [vmem:[#allocation6 + $0x20] sm:$0xff]
    %v54 = vld [vmem:[#allocation6 + $0x28] sm:$0xff]
    %v55 = vld [vmem:[#allocation6 + $0x30] sm:$0xff]
    %v56 = vld [vmem:[#allocation6 + $0x38] sm:$0xff]
    %v57 = vld [vmem:[#allocation6 + $0x40] sm:$0xff]
    %v58 = vld [vmem:[#allocation6 + $0x48] sm:$0xff]
    %v59 = vld [vmem:[#allocation6 + $0x50] sm:$0xff]
    %v60 = vld [vmem:[#allocation6 + $0x58] sm:$0xff]
    %v61 = vld [vmem:[#allocation6 + $0x60] sm:$0xff]
    %v62 = vld [vmem:[#allocation6 + $0x68] sm:$0xff]
    %v63 = vld [vmem:[#allocation6 + $0x70] sm:$0xff]
    %v64 = vld [vmem:[#allocation6 + $0x78] sm:$0xff]
    %65 = vmatpush.msra.mxu0 %v64
    %66 = vmatpush.msra.mxu0 %v63
    %67 = vmatpush.msra.mxu0 %v62
    %68 = vmatpush.msra.mxu0 %v61
    %69 = vmatpush.msra.mxu0 %v60
    %70 = vmatpush.msra.mxu0 %v59
    %71 = vmatpush.msra.mxu0 %v58
    %72 = vmatpush.msra.mxu0 %v57
    %73 = vmatpush.msra.mxu0 %v56
    %74 = vmatpush.msra.mxu0 %v55
    %75 = vmatpush.msra.mxu0 %v54
    %76 = vmatpush.msra.mxu0 %v53
    %77 = vmatpush.msra.mxu0 %v52
    %78 = vmatpush.msra.mxu0 %v51
    %79 = vmatpush.msra.mxu0 %v50
    %80 = vmatpush.msra.mxu0 %v49
    %81 = vmatmul.f32.gmra.mxu0 %v48
    %v82 = vpop.f32.mrf.mxu0
    %v83 = vadd.f32 0.0, %v82
    %84 = vdwg.mxu0
    %v85 = vadd.f32 %v47, %v83
    %86 = vst [vmem:[#allocation2] sm:$0xff] %v85
    // Predicated region
    $region22: #{tpu_custom_call.1} parent=1 // pred_check
      %p87 = pneg %p42
    $region23: #{tpu_custom_call.1} parent=1 // pred_check_branch
      %89 = sbr.rel (%p87) target = $region25
    $region24: #{tpu_custom_call.1} parent=1 // pred_region
      %v90 = vld [vmem:[#allocation2] sm:$0xff]
      %v91 = vsub.f32 0.0, %v90
      %v92 = vmul.f32 %v91, 1.442695
      %v93 = vpow.pop %v92
      %v94 = vadd.f32 %v93, 1.0
      %v95 = vrcp.pop %v94
      %96 = vst [vmem:[#allocation8] sm:$0xff] %v95
    $region25: #{tpu_custom_call.1} parent=1 // pred_fallthru
      _
    // Predicated region
    $region26: #{tpu_custom_call.1} parent=1 // pred_check
      _
    $region27: #{tpu_custom_call.1} parent=1 // pred_check_branch
      %98 = sbr.rel (0) target = $region29
    $region28: #{tpu_custom_call.1} parent=1 // pred_region
      %100 = vsyncadd [#allocation5], 0
      %s102 = sshll.u32 [#allocation8], 4
      %s103 = int_to_ptr.vmem [resolvable:$true] %s102
      %s104 = sshll.u32 %s2, 4
      %s105 = int_to_ptr.hbm [resolvable:$true] %s104
      %107 = dma.vmem_to_hbm [thread:$0]  %s103, 128, %s105, [#allocation5]
    $region29: #{tpu_custom_call.1} parent=1 // pred_fallthru
      _
    // Predicated region
    $region30: #{tpu_custom_call.1} parent=1 // pred_check
      _
    $region31: #{tpu_custom_call.1} parent=1 // pred_check_branch
      %109 = sbr.rel (0) target = $region33
    $region32: #{tpu_custom_call.1} parent=1 // pred_region
      %111 = dma.done [#allocation5], 128
    $region33: #{tpu_custom_call.1} parent=1 // pred_fallthru
      _
    %112 = vsyncpa [#allocation4], 1
    %113 = vsyncpa [#allocation7], 1
    %114 = vsyncpa [#allocation5], 1

</llo_original>
